<compile_context>
chip_gen: v6e
topology: v6e:2x2x1
jax: 0.10.0
libtpu: 0.0.40
codegen_flags: <defaults>
</compile_context>

<pallas_src>
import functools

import jax
import jax.numpy as jnp
from jax.experimental import pallas as pl
from jax.experimental.pallas import tpu as pltpu

EPS = 1e-5


def _cnn_block_kernel(x_ref, wpw_ref, wtc_ref, btc_ref, mp_scale_ref, mp_shift_ref,
                      out_ref, taps_ref, *, bc, dilations, T, V, b_tile):
    """One batch-tile per grid step; everything lane-dense (last dim = b_tile*T*V)."""
    TV = T * V
    Lb = b_tile * TV
    nb = len(dilations)
    n_stem = (nb + 1) * bc          # rows that get the stem ReLU (4 dil stems + maxpool stem)

    # ---- ALL seven 1x1 convolutions (BN + bias folded via the constant-1 row of x) ----
    h = jnp.dot(wpw_ref[...], x_ref[...], preferred_element_type=jnp.float32)   # (96, Lb) f32

    h_act = jnp.maximum(h[0:n_stem], 0.0)                                       # (40, Lb)

    # Lane position within one batch element, hoisted once.  The masks below both implement the
    # temporal zero-padding AND cancel the roll wraparound across batch-element boundaries.
    pos = jax.lax.broadcasted_iota(jnp.int32, (1, Lb), 1) % TV

    # ---- dilated 3x1 temporal convs: masked lane rolls (XLU) staged into a VMEM scratch ----
    for i, d in enumerate(dilations):
        dv = d * V
        yb = h_act[i * bc:(i + 1) * bc]                                          # (bc, Lb)
        prev = jnp.where(pos >= dv, pltpu.roll(yb, dv, axis=1), 0.0)             # y[t - d]
        nxt = jnp.where(pos < TV - dv, pltpu.roll(yb, Lb - dv, axis=1), 0.0)     # y[t + d]
        base = 3 * i * bc                                                        # multiple of 8
        taps_ref[base:base + bc] = prev.astype(taps_ref.dtype)
        taps_ref[base + bc:base + 2 * bc] = yb.astype(taps_ref.dtype)
        taps_ref[base + 2 * bc:base + 3 * bc] = nxt.astype(taps_ref.dtype)

    out_dil = (jnp.dot(wtc_ref[...], taps_ref[...], preferred_element_type=jnp.float32)
               + btc_ref[...])                                                   # (32, Lb) f32

    # ---- maxpool branch: 3x1 max over T, pad 1.  Zero pad == -inf pad since y5 >= 0. ----
    y5 = h_act[nb * bc:n_stem]                                                   # (bc, Lb)
    p_prev = jnp.where(pos >= V, pltpu.roll(y5, V, axis=1), 0.0)
    p_next = jnp.where(pos < TV - V, pltpu.roll(y5, Lb - V, axis=1), 0.0)
    mp = jnp.maximum(jnp.maximum(p_prev, y5), p_next)
    out_mp = mp * mp_scale_ref[...] + mp_shift_ref[...]                          # post-pool BN

    out_b6 = h[n_stem:n_stem + bc]                                               # (bc, Lb)
    res = h[n_stem + bc:]                                                        # (Cout, Lb)

    # ---- direct, sublane-aligned output slice stores (row offsets 0, 32, 40) ----
    out_ref[0:nb * bc] = (out_dil + res[0:nb * bc]).astype(out_ref.dtype)
    out_ref[nb * bc:n_stem] = (out_mp + res[nb * bc:n_stem]).astype(out_ref.dtype)
    out_ref[n_stem:] = (out_b6 + res[n_stem:]).astype(out_ref.dtype)


def _fold_bn(w, b, bn):
    """Fold eval-mode BatchNorm (real running stats) into a preceding conv's weight/bias."""
    s = bn['gamma'] / jnp.sqrt(bn['var'] + EPS)
    shift = bn['beta'] - bn['mean'] * s
    return w * s.reshape((-1,) + (1,) * (w.ndim - 1)), b * s + shift


def _pick_b_tile(N, cap=16):
    """Largest divisor of N <= cap, preferring >= 2 grid steps (v7x megacore)."""
    divs = [d for d in range(1, N + 1) if N % d == 0 and d <= cap]
    pref = [d for d in divs if N // d >= 2]
    return max(pref) if pref else max(divs)


def cnn_block(x, params, dilations=(1, 2, 3, 4), compute_dtype=jnp.bfloat16, b_tile=None):
    """CNNBlock forward (eval-mode BN, stride=1, mode='TV').  x: (N, Cin, T, V) f32."""
    N, Cin, T, V = x.shape
    TV = T * V
    assert TV % 128 == 0, "lane-dense layout needs T*V % 128 == 0"
    nb = len(dilations)
    bc = params['mp']['pw_w'].shape[0]
    Cout = params['res']['w'].shape[0]
    assert Cout == (nb + 2) * bc

    if b_tile is None:
        b_tile = _pick_b_tile(N)
    assert N % b_tile == 0
    Lb = b_tile * TV

    # --- stack all 1x1 convs (BN folded), bias folded as an extra input column ---
    W_rows, b_rows = [], []
    for br in params['dil']:
        w, b = _fold_bn(br['pw_w'], br['pw_b'], br['pw_bn'])
        W_rows.append(w); b_rows.append(b)
    w, b = _fold_bn(params['mp']['pw_w'], params['mp']['pw_b'], params['mp']['pw_bn'])
    W_rows.append(w); b_rows.append(b)
    w, b = _fold_bn(params['b6']['w'], params['b6']['b'], params['b6']['bn'])
    W_rows.append(w); b_rows.append(b)
    w, b = _fold_bn(params['res']['w'], params['res']['b'], params['res']['bn'])
    W_rows.append(w); b_rows.append(b)
    Wpw = jnp.concatenate(
        [jnp.concatenate(W_rows, axis=0), jnp.concatenate(b_rows, axis=0)[:, None]],
        axis=1).astype(compute_dtype)                       # ((nb+2)*bc + Cout, Cin + 1)

    # --- block-diagonal, tap-stacked temporal-conv matrix (BN folded) ---
    Wtc = jnp.zeros((nb * bc, nb * 3 * bc), jnp.float32)
    btc_rows = []
    for i, br in enumerate(params['dil']):
        w3, b3 = _fold_bn(br['tc_w'], br['tc_b'], br['tc_bn'])     # (bc, bc, 3), (bc,)
        wflat = jnp.concatenate([w3[:, :, k] for k in range(3)], axis=1)   # (bc, 3*bc)
        Wtc = Wtc.at[i * bc:(i + 1) * bc, i * 3 * bc:(i + 1) * 3 * bc].set(wflat)
        btc_rows.append(b3)
    Wtc = Wtc.astype(compute_dtype)
    btc = jnp.concatenate(btc_rows, axis=0)[:, None]

    mbn = params['mp']['pool_bn']
    s = mbn['gamma'] / jnp.sqrt(mbn['var'] + EPS)
    mp_scale = s[:, None]
    mp_shift = (mbn['beta'] - mbn['mean'] * s)[:, None]

    # lane-dense input: (Cin + 1, N*T*V) with a constant-1 row (bias fold); layout plumbing only
    xw = jnp.concatenate(
        [jnp.transpose(x, (1, 0, 2, 3)).reshape(Cin, N * TV),
         jnp.ones((1, N * TV), x.dtype)], axis=0).astype(compute_dtype)

    kernel = functools.partial(_cnn_block_kernel, bc=bc, dilations=tuple(dilations),
                               T=T, V=V, b_tile=b_tile)

    def full_spec(arr):
        nd = arr.ndim
        return pl.BlockSpec(arr.shape, lambda n, _nd=nd: (0,) * _nd)

    grid_spec = pltpu.PrefetchScalarGridSpec(
        num_scalar_prefetch=0,
        grid=(N // b_tile,),
        in_specs=[
            pl.BlockSpec((Cin + 1, Lb), lambda n: (0, n)),   # x, batch-tiled in the lane dim
            full_spec(Wpw), full_spec(Wtc), full_spec(btc),  # stacked 1x1 / temporal weights
            full_spec(mp_scale), full_spec(mp_shift),        # post-pool BN affine
        ],
        out_specs=pl.BlockSpec((Cout, Lb), lambda n: (0, n)),
        scratch_shapes=[pltpu.VMEM((nb * 3 * bc, Lb), compute_dtype)],   # frame-shifted taps
    )
    out = pl.pallas_call(
        kernel,
        out_shape=jax.ShapeDtypeStruct((Cout, N * TV), jnp.float32),
        grid_spec=grid_spec,
        compiler_params=pltpu.CompilerParams(dimension_semantics=("parallel",)),
    )(xw, Wpw, Wtc, btc, mp_scale, mp_shift)
    return out.reshape(Cout, N, T, V).transpose(1, 0, 2, 3)


def reference_forward(x, params, dilations=(1, 2, 3, 4)):
    """Pure-JAX transcription of CNNBlock.forward (eval-mode BN, stride=1) for verification."""
    def bn(v, p):
        s = p['gamma'] / jnp.sqrt(p['var'] + EPS)
        return v * s[None, :, None, None] + (p['beta'] - p['mean'] * s)[None, :, None, None]

    def conv1x1(v, w, b):
        return jnp.einsum('oc,nctv->notv', w, v) + b[None, :, None, None]

    def tconv(v, w, b, d):                       # (3,1) conv along T, dilation d, padding d
        out = jax.lax.conv_general_dilated(
            v, w[:, :, :, None], window_strides=(1, 1),
            padding=[(d, d), (0, 0)], rhs_dilation=(d, 1),
            dimension_numbers=('NCHW', 'OIHW', 'NCHW'))
        return out + b[None, :, None, None]

    branch_outs = []
    for d, br in zip(dilations, params['dil']):
        y = jax.nn.relu(bn(conv1x1(x, br['pw_w'], br['pw_b']), br['pw_bn']))
        branch_outs.append(bn(tconv(y, br['tc_w'], br['tc_b'], d), br['tc_bn']))

    mp = params['mp']
    y = jax.nn.relu(bn(conv1x1(x, mp['pw_w'], mp['pw_b']), mp['pw_bn']))
    pooled = jax.lax.reduce_window(
        y, -jnp.inf, jax.lax.max, (1, 1, 3, 1), (1, 1, 1, 1),
        [(0, 0), (0, 0), (1, 1), (0, 0)])
    branch_outs.append(bn(pooled, mp['pool_bn']))

    branch_outs.append(bn(conv1x1(x, params['b6']['w'], params['b6']['b']), params['b6']['bn']))

    res = bn(conv1x1(x, params['res']['w'], params['res']['b']), params['res']['bn'])
    return jnp.concatenate(branch_outs, axis=1) + res


def init_params(key, Cin, Cout, n_dil=4):
    """Deterministic synthetic parameters with non-trivial BN running statistics."""
    assert Cout % (n_dil + 2) == 0, '# out channels should be multiples of # branches'
    bc = Cout // (n_dil + 2)
    keys = iter(jax.random.split(key, 80))

    def conv_w(shape, fan_out):                 # kaiming_normal_, mode='fan_out'
        return jax.random.normal(next(keys), shape, jnp.float32) * jnp.sqrt(2.0 / fan_out)

    def bias(c):
        return jax.random.normal(next(keys), (c,), jnp.float32) * 0.1

    def bn_p(c):
        return dict(
            gamma=1.0 + 0.1 * jax.random.normal(next(keys), (c,), jnp.float32),
            beta=0.1 * jax.random.normal(next(keys), (c,), jnp.float32),
            mean=0.1 * jax.random.normal(next(keys), (c,), jnp.float32),
            var=0.5 + jax.random.uniform(next(keys), (c,), jnp.float32),
        )

    dil = []
    for _ in range(n_dil):
        dil.append(dict(
            pw_w=conv_w((bc, Cin), bc), pw_b=bias(bc), pw_bn=bn_p(bc),
            tc_w=conv_w((bc, bc, 3), bc * 3), tc_b=bias(bc), tc_bn=bn_p(bc),
        ))
    return dict(
        dil=dil,
        mp=dict(pw_w=conv_w((bc, Cin), bc), pw_b=bias(bc), pw_bn=bn_p(bc), pool_bn=bn_p(bc)),
        b6=dict(w=conv_w((bc, Cin), bc), b=bias(bc), bn=bn_p(bc)),
        res=dict(w=conv_w((Cout, Cin), Cout), b=bias(Cout), bn=bn_p(Cout)),
    )


if __name__ == "__main__":
    Cin, Cout, T, V = 16, 48, 16, 16              # 6 branches -> branch_channels = 8; T*V = 256
    key = jax.random.PRNGKey(0)
    kx, kp = jax.random.split(key)
    params = init_params(kp, Cin, Cout)

    # (N, matmul dtype, tolerance class): f32 path validates exact structure (incl. batched lane
    # rolls/masks with N=8 -> b_tile=4); bf16 path is the performance configuration.
    configs = ((2, jnp.float32, 2e-3), (8, jnp.float32, 2e-3), (8, jnp.bfloat16, 5e-2))
    for N, dtype, rel_tol in configs:
        x = jax.random.normal(jax.random.fold_in(kx, N), (N, Cin, T, V), jnp.float32)
        out = jax.block_until_ready(cnn_block(x, params, compute_dtype=dtype))
        ref = reference_forward(x, params)
        assert out.shape == (N, Cout, T, V)
        max_diff = float(jnp.max(jnp.abs(out - ref)))
        scale = max(float(jnp.max(jnp.abs(ref))), 1.0)
        assert max_diff <= rel_tol * scale, (
            f"N={N} dtype={dtype.__name__}: max abs diff {max_diff} (scale {scale})")
    print("KERNEL_OK")
</pallas_src>

<mosaic_0001>
module attributes {stable_mosaic.version = 11 : i64} {
  func.func @_cnn_block_kernel(%arg0: i32, %arg1: memref<17x256xf32, #tpu.memory_space<vmem>>, %arg2: memref<96x17xf32, #tpu.memory_space<vmem>>, %arg3: memref<32x96xf32, #tpu.memory_space<vmem>>, %arg4: memref<32x1xf32, #tpu.memory_space<vmem>>, %arg5: memref<8x1xf32, #tpu.memory_space<vmem>>, %arg6: memref<8x1xf32, #tpu.memory_space<vmem>>, %arg7: memref<48x256xf32, #tpu.memory_space<vmem>>, %arg8: memref<96x256xf32, #tpu.memory_space<vmem>>) attributes {dimension_semantics = [#tpu.dimension_semantics<parallel>], iteration_bounds = array<i64: 2>, scalar_prefetch = 0 : i64, scratch_operands = 1 : i64, tpu.core_type = #tpu.core_type<tc>, window_params = [{transform_indices = @transform_0, window_bounds = array<i64: 17, 256>}, {pipeline_mode = #tpu.pipeline_mode<synchronous>, transform_indices = @transform_1, window_bounds = array<i64: 96, 17>}, {pipeline_mode = #tpu.pipeline_mode<synchronous>, transform_indices = @transform_2, window_bounds = array<i64: 32, 96>}, {pipeline_mode = #tpu.pipeline_mode<synchronous>, transform_indices = @transform_3, window_bounds = array<i64: 32, 1>}, {pipeline_mode = #tpu.pipeline_mode<synchronous>, transform_indices = @transform_4, window_bounds = array<i64: 8, 1>}, {pipeline_mode = #tpu.pipeline_mode<synchronous>, transform_indices = @transform_5, window_bounds = array<i64: 8, 1>}, {transform_indices = @transform_6, window_bounds = array<i64: 48, 256>}]} {
    %c0 = arith.constant 0 : index
    %c0_0 = arith.constant 0 : index
    %0 = vector.load %arg2[%c0, %c0_0] : memref<96x17xf32, #tpu.memory_space<vmem>>, vector<96x17xf32>
    %c0_1 = arith.constant 0 : index
    %c0_2 = arith.constant 0 : index
    %1 = vector.load %arg1[%c0_1, %c0_2] : memref<17x256xf32, #tpu.memory_space<vmem>>, vector<17x256xf32>
    %cst = arith.constant dense<0.000000e+00> : vector<96x256xf32>
    %2 = tpu.matmul %0, %1, %cst {dimension_numbers = #tpu.dot_dimension_numbers<[1], [0], [0], [1], [0, 0, 1, 1], [], []>} : vector<96x17xf32>, vector<17x256xf32>, vector<96x256xf32> -> vector<96x256xf32>
    %3 = vector.extract_strided_slice %2 {offsets = [0, 0], sizes = [40, 256], strides = [1, 1]} : vector<96x256xf32> to vector<40x256xf32>
    %cst_3 = arith.constant 0.000000e+00 : f32
    %4 = vector.broadcast %cst_3 : f32 to vector<40x256xf32>
    %5 = arith.maximumf %3, %4 : vector<40x256xf32>
    %6 = tpu.iota {dimensions = array<i32: 1>} : vector<1x256xi32>
    %c256_i32 = arith.constant 256 : i32
    %c0_i32 = arith.constant 0 : i32
    %7 = arith.cmpi eq, %c256_i32, %c0_i32 : i32
    %c1_i32 = arith.constant 1 : i32
    %8 = arith.select %7, %c1_i32, %c256_i32 : i32
    %9 = vector.broadcast %8 : i32 to vector<1x256xi32>
    %10 = arith.remsi %6, %9 : vector<1x256xi32>
    %c0_i32_4 = arith.constant 0 : i32
    %11 = vector.broadcast %c0_i32_4 : i32 to vector<1x256xi32>
    %12 = arith.cmpi ne, %10, %11 : vector<1x256xi32>
    %c0_i32_5 = arith.constant 0 : i32
    %13 = vector.broadcast %c0_i32_5 : i32 to vector<1x256xi32>
    %14 = arith.cmpi slt, %10, %13 : vector<1x256xi32>
    %c0_i32_6 = arith.constant 0 : i32
    %15 = arith.cmpi slt, %8, %c0_i32_6 : i32
    %16 = vector.broadcast %15 : i1 to vector<1x256xi1>
    %17 = vector.broadcast %16 : vector<1x256xi1> to vector<1x256xi1>
    %18 = arith.xori %14, %17 : vector<1x256xi1>
    %19 = arith.andi %18, %12 : vector<1x256xi1>
    %20 = vector.broadcast %8 : i32 to vector<1x256xi32>
    %21 = arith.addi %10, %20 : vector<1x256xi32>
    %22 = arith.select %19, %21, %10 : vector<1x256xi1>, vector<1x256xi32>
    %23 = vector.extract_strided_slice %5 {offsets = [0, 0], sizes = [8, 256], strides = [1, 1]} : vector<40x256xf32> to vector<8x256xf32>
    %c16_i32 = arith.constant 16 : i32
    %24 = vector.broadcast %c16_i32 : i32 to vector<1x256xi32>
    %25 = arith.cmpi sge, %22, %24 : vector<1x256xi32>
    %c16_i32_7 = arith.constant 16 : i32
    %26 = tpu.dynamic_rotate %23 by %c16_i32_7 dim 1 : vector<8x256xf32>, i32 -> vector<8x256xf32>
    %cst_8 = arith.constant 0.000000e+00 : f32
    %27 = vector.shape_cast %25 : vector<1x256xi1> to vector<1x256xi1>
    %28 = vector.broadcast %27 : vector<1x256xi1> to vector<8x256xi1>
    %29 = vector.broadcast %cst_8 : f32 to vector<8x256xf32>
    %30 = arith.select %28, %26, %29 : vector<8x256xi1>, vector<8x256xf32>
    %c240_i32 = arith.constant 240 : i32
    %31 = vector.broadcast %c240_i32 : i32 to vector<1x256xi32>
    %32 = arith.cmpi slt, %22, %31 : vector<1x256xi32>
    %c240_i32_9 = arith.constant 240 : i32
    %33 = tpu.dynamic_rotate %23 by %c240_i32_9 dim 1 : vector<8x256xf32>, i32 -> vector<8x256xf32>
    %cst_10 = arith.constant 0.000000e+00 : f32
    %34 = vector.shape_cast %32 : vector<1x256xi1> to vector<1x256xi1>
    %35 = vector.broadcast %34 : vector<1x256xi1> to vector<8x256xi1>
    %36 = vector.broadcast %cst_10 : f32 to vector<8x256xf32>
    %37 = arith.select %35, %33, %36 : vector<8x256xi1>, vector<8x256xf32>
    %c0_11 = arith.constant 0 : index
    %c0_12 = arith.constant 0 : index
    %38 = vector.load %arg8[%c0_11, %c0_12] : memref<96x256xf32, #tpu.memory_space<vmem>>, vector<8x256xf32>
    tpu.vector_store %arg8[%c0_11, %c0_12], %30 {strides = array<i32>} : memref<96x256xf32, #tpu.memory_space<vmem>>, vector<8x256xf32>,
    %c8 = arith.constant 8 : index
    %c0_13 = arith.constant 0 : index
    %39 = vector.load %arg8[%c8, %c0_13] : memref<96x256xf32, #tpu.memory_space<vmem>>, vector<8x256xf32>
    tpu.vector_store %arg8[%c8, %c0_13], %23 {strides = array<i32>} : memref<96x256xf32, #tpu.memory_space<vmem>>, vector<8x256xf32>,
    %c16 = arith.constant 16 : index
    %c0_14 = arith.constant 0 : index
    %40 = vector.load %arg8[%c16, %c0_14] : memref<96x256xf32, #tpu.memory_space<vmem>>, vector<8x256xf32>
    tpu.vector_store %arg8[%c16, %c0_14], %37 {strides = array<i32>} : memref<96x256xf32, #tpu.memory_space<vmem>>, vector<8x256xf32>,
    %41 = vector.extract_strided_slice %5 {offsets = [8, 0], sizes = [8, 256], strides = [1, 1]} : vector<40x256xf32> to vector<8x256xf32>
    %c32_i32 = arith.constant 32 : i32
    %42 = vector.broadcast %c32_i32 : i32 to vector<1x256xi32>
    %43 = arith.cmpi sge, %22, %42 : vector<1x256xi32>
    %c32_i32_15 = arith.constant 32 : i32
    %44 = tpu.dynamic_rotate %41 by %c32_i32_15 dim 1 : vector<8x256xf32>, i32 -> vector<8x256xf32>
    %cst_16 = arith.constant 0.000000e+00 : f32
    %45 = vector.shape_cast %43 : vector<1x256xi1> to vector<1x256xi1>
    %46 = vector.broadcast %45 : vector<1x256xi1> to vector<8x256xi1>
    %47 = vector.broadcast %cst_16 : f32 to vector<8x256xf32>
    %48 = arith.select %46, %44, %47 : vector<8x256xi1>, vector<8x256xf32>
    %c224_i32 = arith.constant 224 : i32
    %49 = vector.broadcast %c224_i32 : i32 to vector<1x256xi32>
    %50 = arith.cmpi slt, %22, %49 : vector<1x256xi32>
    %c224_i32_17 = arith.constant 224 : i32
    %51 = tpu.dynamic_rotate %41 by %c224_i32_17 dim 1 : vector<8x256xf32>, i32 -> vector<8x256xf32>
    %cst_18 = arith.constant 0.000000e+00 : f32
    %52 = vector.shape_cast %50 : vector<1x256xi1> to vector<1x256xi1>
    %53 = vector.broadcast %52 : vector<1x256xi1> to vector<8x256xi1>
    %54 = vector.broadcast %cst_18 : f32 to vector<8x256xf32>
    %55 = arith.select %53, %51, %54 : vector<8x256xi1>, vector<8x256xf32>
    %c24 = arith.constant 24 : index
    %c0_19 = arith.constant 0 : index
    %56 = vector.load %arg8[%c24, %c0_19] : memref<96x256xf32, #tpu.memory_space<vmem>>, vector<8x256xf32>
    tpu.vector_store %arg8[%c24, %c0_19], %48 {strides = array<i32>} : memref<96x256xf32, #tpu.memory_space<vmem>>, vector<8x256xf32>,
    %c32 = arith.constant 32 : index
    %c0_20 = arith.constant 0 : index
    %57 = vector.load %arg8[%c32, %c0_20] : memref<96x256xf32, #tpu.memory_space<vmem>>, vector<8x256xf32>
    tpu.vector_store %arg8[%c32, %c0_20], %41 {strides = array<i32>} : memref<96x256xf32, #tpu.memory_space<vmem>>, vector<8x256xf32>,
    %c40 = arith.constant 40 : index
    %c0_21 = arith.constant 0 : index
    %58 = vector.load %arg8[%c40, %c0_21] : memref<96x256xf32, #tpu.memory_space<vmem>>, vector<8x256xf32>
    tpu.vector_store %arg8[%c40, %c0_21], %55 {strides = array<i32>} : memref<96x256xf32, #tpu.memory_space<vmem>>, vector<8x256xf32>,
    %59 = vector.extract_strided_slice %5 {offsets = [16, 0], sizes = [8, 256], strides = [1, 1]} : vector<40x256xf32> to vector<8x256xf32>
    %c48_i32 = arith.constant 48 : i32
    %60 = vector.broadcast %c48_i32 : i32 to vector<1x256xi32>
    %61 = arith.cmpi sge, %22, %60 : vector<1x256xi32>
    %c48_i32_22 = arith.constant 48 : i32
    %62 = tpu.dynamic_rotate %59 by %c48_i32_22 dim 1 : vector<8x256xf32>, i32 -> vector<8x256xf32>
    %cst_23 = arith.constant 0.000000e+00 : f32
    %63 = vector.shape_cast %61 : vector<1x256xi1> to vector<1x256xi1>
    %64 = vector.broadcast %63 : vector<1x256xi1> to vector<8x256xi1>
    %65 = vector.broadcast %cst_23 : f32 to vector<8x256xf32>
    %66 = arith.select %64, %62, %65 : vector<8x256xi1>, vector<8x256xf32>
    %c208_i32 = arith.constant 208 : i32
    %67 = vector.broadcast %c208_i32 : i32 to vector<1x256xi32>
    %68 = arith.cmpi slt, %22, %67 : vector<1x256xi32>
    %c208_i32_24 = arith.constant 208 : i32
    %69 = tpu.dynamic_rotate %59 by %c208_i32_24 dim 1 : vector<8x256xf32>, i32 -> vector<8x256xf32>
    %cst_25 = arith.constant 0.000000e+00 : f32
    %70 = vector.shape_cast %68 : vector<1x256xi1> to vector<1x256xi1>
    %71 = vector.broadcast %70 : vector<1x256xi1> to vector<8x256xi1>
    %72 = vector.broadcast %cst_25 : f32 to vector<8x256xf32>
    %73 = arith.select %71, %69, %72 : vector<8x256xi1>, vector<8x256xf32>
    %c48 = arith.constant 48 : index
    %c0_26 = arith.constant 0 : index
    %74 = vector.load %arg8[%c48, %c0_26] : memref<96x256xf32, #tpu.memory_space<vmem>>, vector<8x256xf32>
    tpu.vector_store %arg8[%c48, %c0_26], %66 {strides = array<i32>} : memref<96x256xf32, #tpu.memory_space<vmem>>, vector<8x256xf32>,
    %c56 = arith.constant 56 : index
    %c0_27 = arith.constant 0 : index
    %75 = vector.load %arg8[%c56, %c0_27] : memref<96x256xf32, #tpu.memory_space<vmem>>, vector<8x256xf32>
    tpu.vector_store %arg8[%c56, %c0_27], %59 {strides = array<i32>} : memref<96x256xf32, #tpu.memory_space<vmem>>, vector<8x256xf32>,
    %c64 = arith.constant 64 : index
    %c0_28 = arith.constant 0 : index
    %76 = vector.load %arg8[%c64, %c0_28] : memref<96x256xf32, #tpu.memory_space<vmem>>, vector<8x256xf32>
    tpu.vector_store %arg8[%c64, %c0_28], %73 {strides = array<i32>} : memref<96x256xf32, #tpu.memory_space<vmem>>, vector<8x256xf32>,
    %77 = vector.extract_strided_slice %5 {offsets = [24, 0], sizes = [8, 256], strides = [1, 1]} : vector<40x256xf32> to vector<8x256xf32>
    %c64_i32 = arith.constant 64 : i32
    %78 = vector.broadcast %c64_i32 : i32 to vector<1x256xi32>
    %79 = arith.cmpi sge, %22, %78 : vector<1x256xi32>
    %c64_i32_29 = arith.constant 64 : i32
    %80 = tpu.dynamic_rotate %77 by %c64_i32_29 dim 1 : vector<8x256xf32>, i32 -> vector<8x256xf32>
    %cst_30 = arith.constant 0.000000e+00 : f32
    %81 = vector.shape_cast %79 : vector<1x256xi1> to vector<1x256xi1>
    %82 = vector.broadcast %81 : vector<1x256xi1> to vector<8x256xi1>
    %83 = vector.broadcast %cst_30 : f32 to vector<8x256xf32>
    %84 = arith.select %82, %80, %83 : vector<8x256xi1>, vector<8x256xf32>
    %c192_i32 = arith.constant 192 : i32
    %85 = vector.broadcast %c192_i32 : i32 to vector<1x256xi32>
    %86 = arith.cmpi slt, %22, %85 : vector<1x256xi32>
    %c192_i32_31 = arith.constant 192 : i32
    %87 = tpu.dynamic_rotate %77 by %c192_i32_31 dim 1 : vector<8x256xf32>, i32 -> vector<8x256xf32>
    %cst_32 = arith.constant 0.000000e+00 : f32
    %88 = vector.shape_cast %86 : vector<1x256xi1> to vector<1x256xi1>
    %89 = vector.broadcast %88 : vector<1x256xi1> to vector<8x256xi1>
    %90 = vector.broadcast %cst_32 : f32 to vector<8x256xf32>
    %91 = arith.select %89, %87, %90 : vector<8x256xi1>, vector<8x256xf32>
    %c72 = arith.constant 72 : index
    %c0_33 = arith.constant 0 : index
    %92 = vector.load %arg8[%c72, %c0_33] : memref<96x256xf32, #tpu.memory_space<vmem>>, vector<8x256xf32>
    tpu.vector_store %arg8[%c72, %c0_33], %84 {strides = array<i32>} : memref<96x256xf32, #tpu.memory_space<vmem>>, vector<8x256xf32>,
    %c80 = arith.constant 80 : index
    %c0_34 = arith.constant 0 : index
    %93 = vector.load %arg8[%c80, %c0_34] : memref<96x256xf32, #tpu.memory_space<vmem>>, vector<8x256xf32>
    tpu.vector_store %arg8[%c80, %c0_34], %77 {strides = array<i32>} : memref<96x256xf32, #tpu.memory_space<vmem>>, vector<8x256xf32>,
    %c88 = arith.constant 88 : index
    %c0_35 = arith.constant 0 : index
    %94 = vector.load %arg8[%c88, %c0_35] : memref<96x256xf32, #tpu.memory_space<vmem>>, vector<8x256xf32>
    tpu.vector_store %arg8[%c88, %c0_35], %91 {strides = array<i32>} : memref<96x256xf32, #tpu.memory_space<vmem>>, vector<8x256xf32>,
    %c0_36 = arith.constant 0 : index
    %c0_37 = arith.constant 0 : index
    %95 = vector.load %arg3[%c0_36, %c0_37] : memref<32x96xf32, #tpu.memory_space<vmem>>, vector<32x96xf32>
    %c0_38 = arith.constant 0 : index
    %c0_39 = arith.constant 0 : index
    %96 = vector.load %arg8[%c0_38, %c0_39] : memref<96x256xf32, #tpu.memory_space<vmem>>, vector<96x256xf32>
    %cst_40 = arith.constant dense<0.000000e+00> : vector<32x256xf32>
    %97 = tpu.matmul %95, %96, %cst_40 {dimension_numbers = #tpu.dot_dimension_numbers<[1], [0], [0], [1], [0, 0, 1, 1], [], []>} : vector<32x96xf32>, vector<96x256xf32>, vector<32x256xf32> -> vector<32x256xf32>
    %c0_41 = arith.constant 0 : index
    %c0_42 = arith.constant 0 : index
    %98 = vector.load %arg4[%c0_41, %c0_42] : memref<32x1xf32, #tpu.memory_space<vmem>>, vector<32x1xf32>
    %99 = vector.broadcast %98 : vector<32x1xf32> to vector<32x256xf32>
    %100 = arith.addf %97, %99 : vector<32x256xf32>
    %101 = vector.extract_strided_slice %5 {offsets = [32, 0], sizes = [8, 256], strides = [1, 1]} : vector<40x256xf32> to vector<8x256xf32>
    %c16_i32_43 = arith.constant 16 : i32
    %102 = vector.broadcast %c16_i32_43 : i32 to vector<1x256xi32>
    %103 = arith.cmpi sge, %22, %102 : vector<1x256xi32>
    %c16_i32_44 = arith.constant 16 : i32
    %104 = tpu.dynamic_rotate %101 by %c16_i32_44 dim 1 : vector<8x256xf32>, i32 -> vector<8x256xf32>
    %cst_45 = arith.constant 0.000000e+00 : f32
    %105 = vector.shape_cast %103 : vector<1x256xi1> to vector<1x256xi1>
    %106 = vector.broadcast %105 : vector<1x256xi1> to vector<8x256xi1>
    %107 = vector.broadcast %cst_45 : f32 to vector<8x256xf32>
    %108 = arith.select %106, %104, %107 : vector<8x256xi1>, vector<8x256xf32>
    %c240_i32_46 = arith.constant 240 : i32
    %109 = vector.broadcast %c240_i32_46 : i32 to vector<1x256xi32>
    %110 = arith.cmpi slt, %22, %109 : vector<1x256xi32>
    %c240_i32_47 = arith.constant 240 : i32
    %111 = tpu.dynamic_rotate %101 by %c240_i32_47 dim 1 : vector<8x256xf32>, i32 -> vector<8x256xf32>
    %cst_48 = arith.constant 0.000000e+00 : f32
    %112 = vector.shape_cast %110 : vector<1x256xi1> to vector<1x256xi1>
    %113 = vector.broadcast %112 : vector<1x256xi1> to vector<8x256xi1>
    %114 = vector.broadcast %cst_48 : f32 to vector<8x256xf32>
    %115 = arith.select %113, %111, %114 : vector<8x256xi1>, vector<8x256xf32>
    %116 = arith.maximumf %108, %101 : vector<8x256xf32>
    %117 = arith.maximumf %116, %115 : vector<8x256xf32>
    %c0_49 = arith.constant 0 : index
    %c0_50 = arith.constant 0 : index
    %118 = vector.load %arg5[%c0_49, %c0_50] : memref<8x1xf32, #tpu.memory_space<vmem>>, vector<8x1xf32>
    %119 = vector.broadcast %118 : vector<8x1xf32> to vector<8x256xf32>
    %120 = arith.mulf %117, %119 : vector<8x256xf32>
    %c0_51 = arith.constant 0 : index
    %c0_52 = arith.constant 0 : index
    %121 = vector.load %arg6[%c0_51, %c0_52] : memref<8x1xf32, #tpu.memory_space<vmem>>, vector<8x1xf32>
    %122 = vector.broadcast %121 : vector<8x1xf32> to vector<8x256xf32>
    %123 = arith.addf %120, %122 : vector<8x256xf32>
    %124 = vector.extract_strided_slice %2 {offsets = [40, 0], sizes = [8, 256], strides = [1, 1]} : vector<96x256xf32> to vector<8x256xf32>
    %125 = vector.extract_strided_slice %2 {offsets = [48, 0], sizes = [48, 256], strides = [1, 1]} : vector<96x256xf32> to vector<48x256xf32>
    %126 = vector.extract_strided_slice %125 {offsets = [0, 0], sizes = [32, 256], strides = [1, 1]} : vector<48x256xf32> to vector<32x256xf32>
    %127 = arith.addf %100, %126 : vector<32x256xf32>
    %c0_53 = arith.constant 0 : index
    %c0_54 = arith.constant 0 : index
    %128 = vector.load %arg7[%c0_53, %c0_54] : memref<48x256xf32, #tpu.memory_space<vmem>>, vector<32x256xf32>
    tpu.vector_store %arg7[%c0_53, %c0_54], %127 {strides = array<i32>} : memref<48x256xf32, #tpu.memory_space<vmem>>, vector<32x256xf32>,
    %129 = vector.extract_strided_slice %125 {offsets = [32, 0], sizes = [8, 256], strides = [1, 1]} : vector<48x256xf32> to vector<8x256xf32>
    %130 = arith.addf %123, %129 : vector<8x256xf32>
    %c32_55 = arith.constant 32 : index
    %c0_56 = arith.constant 0 : index
    %131 = vector.load %arg7[%c32_55, %c0_56] : memref<48x256xf32, #tpu.memory_space<vmem>>, vector<8x256xf32>
    tpu.vector_store %arg7[%c32_55, %c0_56], %130 {strides = array<i32>} : memref<48x256xf32, #tpu.memory_space<vmem>>, vector<8x256xf32>,
    %132 = vector.extract_strided_slice %125 {offsets = [40, 0], sizes = [8, 256], strides = [1, 1]} : vector<48x256xf32> to vector<8x256xf32>
    %133 = arith.addf %124, %132 : vector<8x256xf32>
    %c40_57 = arith.constant 40 : index
    %c0_58 = arith.constant 0 : index
    %134 = vector.load %arg7[%c40_57, %c0_58] : memref<48x256xf32, #tpu.memory_space<vmem>>, vector<8x256xf32>
    tpu.vector_store %arg7[%c40_57, %c0_58], %133 {strides = array<i32>} : memref<48x256xf32, #tpu.memory_space<vmem>>, vector<8x256xf32>,
    return
  }
  func.func @transform_0(%arg0: i32) -> (i32, i32) {
    %c0_i32 = arith.constant 0 : i32
    %c0_i32_0 = arith.constant 0 : i32
    return %c0_i32, %arg0 : i32, i32
  }
  func.func @transform_1(%arg0: i32) -> (i32, i32) {
    %c0_i32 = arith.constant 0 : i32
    %c0_i32_0 = arith.constant 0 : i32
    %c0_i32_1 = arith.constant 0 : i32
    return %c0_i32, %c0_i32_0 : i32, i32
  }
  func.func @transform_2(%arg0: i32) -> (i32, i32) {
    %c0_i32 = arith.constant 0 : i32
    %c0_i32_0 = arith.constant 0 : i32
    %c0_i32_1 = arith.constant 0 : i32
    return %c0_i32, %c0_i32_0 : i32, i32
  }
  func.func @transform_3(%arg0: i32) -> (i32, i32) {
    %c0_i32 = arith.constant 0 : i32
    %c0_i32_0 = arith.constant 0 : i32
    %c0_i32_1 = arith.constant 0 : i32
    return %c0_i32, %c0_i32_0 : i32, i32
  }
  func.func @transform_4(%arg0: i32) -> (i32, i32) {
    %c0_i32 = arith.constant 0 : i32
    %c0_i32_0 = arith.constant 0 : i32
    %c0_i32_1 = arith.constant 0 : i32
    return %c0_i32, %c0_i32_0 : i32, i32
  }
  func.func @transform_5(%arg0: i32) -> (i32, i32) {
    %c0_i32 = arith.constant 0 : i32
    %c0_i32_0 = arith.constant 0 : i32
    %c0_i32_1 = arith.constant 0 : i32
    return %c0_i32, %c0_i32_0 : i32, i32
  }
  func.func @transform_6(%arg0: i32) -> (i32, i32) {
    %c0_i32 = arith.constant 0 : i32
    %c0_i32_0 = arith.constant 0 : i32
    return %c0_i32, %arg0 : i32, i32
  }
}

</mosaic_0001>

<llo_original>
// kernel: tpu_custom_call.1
$region0: #{tpu_custom_call.1}
  #allocation0 [shape = 'u32[]', space=smem, size = 0x4, offset = 0x4, fixed_abs, tag = 'smem constant byte address 0x4 - core index']
  #allocation1 [shape = 'u32[144,128]{1,0:T(1,128)}', space=vmem, size = 0x12000, scoped, tag = 'internal scratch']
  #allocation2 [shape = 'f32[96,256]{1,0:T(8,128)}', space=vmem, size = 0x18000, scoped, tag = 'scratch operand']
  %s0 = inlined_call_operand.vmem [shape: f32[17,512], index: 0, kind: input, shape index: {}]
  %s1 = inlined_call_operand.vmem [shape: f32[96,17], index: 1, kind: input, shape index: {}]
  %s2 = inlined_call_operand.vmem [shape: f32[32,96], index: 2, kind: input, shape index: {}]
  %s3 = inlined_call_operand.vmem [shape: f32[32,1], index: 3, kind: input, shape index: {}]
  %s4 = inlined_call_operand.vmem [shape: f32[8,1], index: 4, kind: input, shape index: {}]
  %s5 = inlined_call_operand.vmem [shape: f32[8,1], index: 5, kind: input, shape index: {}]
  %s6 = inlined_call_operand.hbm [shape: f32[48,512], index: 6, kind: output, shape index: {}]
  %s7 = sld [smem:[#allocation0]]
  $region80: #{tpu_custom_call.1} parent=0
    _
  %s9 = ssub.s32 1, %s7
  %s10 = scalar_select 0, %s9, %s7
  $region1: #{tpu_custom_call.1} parent=0
    #allocation3 [shape = 'u8[49152]{0}', space=vmem, size = 0xc000, scoped, tag = 'input window, operand 0']
    #allocation4 [shape = 'u8[98304]{0}', space=vmem, size = 0x18000, scoped, tag = 'output window, operand 0']
    #allocation5 [shape = 's32[2]{0}', space=sflag, size = 0x8, scoped, tag = 'scoped memory for tpu_custom_call.1']
    %11 = vsyncpa [#allocation5], 0
    %s12 = scalar_lea.sflag [#allocation5], 1
    %13 = vsyncpa %s12, 0
    loop: start=0, step=1, limit=4
    $region2: #{tpu_custom_call.1} parent=1 // loop_pre_header
      _
    $region3: #{tpu_custom_call.1} parent=1 // loop_header
      %s15 = sphi 0, %s19
      %p16 = scmp.ge.s32.totalorder %s15, 4
      %s25 = sphi 0, %s27
      %s28 = sphi 0, %s25
      %s29 = sphi 0, %s28
      %s45 = sphi 0, %s29
      %s49 = sphi 0, %s49
      %s51 = sphi 0, %s49
      %s52 = sphi 0, %s51
      %s66 = sphi 0, %s52
      %s70 = sphi 0, %s70
      %s72 = sphi 0, %s70
      %s73 = sphi 0, %s72
      %s87 = sphi 0, %s73
      %s91 = sphi 0, %s91
      %s93 = sphi 0, %s91
      %s94 = sphi 0, %s93
      %s108 = sphi 0, %s94
      %s112 = sphi 0, %s112
      %s114 = sphi 0, %s112
      %s115 = sphi 0, %s114
      %s129 = sphi 0, %s115
      %s133 = sphi 0, %s133
      %s135 = sphi 0, %s133
      %s136 = sphi 0, %s135
      %s150 = sphi 0, %s136
      %s156 = sphi 0, %s158
      %s159 = sphi 0, %s156
      %s160 = sphi 0, %s159
      %s176 = sphi 0, %s160
    $region4: #{tpu_custom_call.1} parent=1 // loop_header_branch
      %18 = sbr.rel (%p16) target = $region8
    $region5: #{tpu_custom_call.1} parent=1 // loop_body
      %s20 = ssub.s32 %s15, 1
      %s21 = ssub.s32 %s15, 2
      %s22 = sadd.s32 %s15, 1
      %s23 = ssub.s32 %s15, %s22
      %p24 = scmp.eq.s32.totalorder %s23, 0
      %s26 = sadd.s32 %s25, 1
      %s27 = scalar_select %p24, %s25, %s26
      %p30 = pneg %p24
      %p31 = scmp.eq.s32.totalorder %s15, 1
      %p32 = por %p30, %p31
      %p33 = scmp.ne.s32.totalorder %s25, %s28
      %p34 = scmp.eq.s32.totalorder %s15, 0
      %p35 = por %p33, %p34
      %p36 = scmp.ne.s32.totalorder %s25, %s28
      %p37 = scmp.eq.s32.totalorder %s20, 1
      %p38 = por %p36, %p37
      %p39 = scmp.ne.s32.totalorder %s28, %s29
      %p40 = scmp.eq.s32.totalorder %s20, 0
      %p41 = por %p39, %p40
      %p42 = scmp.ne.s32.totalorder %s28, %s29
      %p43 = scmp.eq.s32.totalorder %s21, 1
      %p44 = por %p42, %p43
      %p46 = scmp.ne.s32.totalorder %s29, %s45
      %p47 = scmp.eq.s32.totalorder %s21, 0
      %p48 = por %p46, %p47
      %s50 = sadd.s32 %s49, 1
      %p53 = scmp.eq.s32.totalorder %s15, 1
      %p54 = scmp.ne.s32.totalorder %s49, %s51
      %p55 = scmp.eq.s32.totalorder %s15, 0
      %p56 = por %p54, %p55
      %p57 = scmp.ne.s32.totalorder %s49, %s51
      %p58 = scmp.eq.s32.totalorder %s20, 1
      %p59 = por %p57, %p58
      %p60 = scmp.ne.s32.totalorder %s51, %s52
      %p61 = scmp.eq.s32.totalorder %s20, 0
      %p62 = por %p60, %p61
      %p63 = scmp.ne.s32.totalorder %s51, %s52
      %p64 = scmp.eq.s32.totalorder %s21, 1
      %p65 = por %p63, %p64
      %p67 = scmp.ne.s32.totalorder %s52, %s66
      %p68 = scmp.eq.s32.totalorder %s21, 0
      %p69 = por %p67, %p68
      %s71 = sadd.s32 %s70, 1
      %p74 = scmp.eq.s32.totalorder %s15, 1
      %p75 = scmp.ne.s32.totalorder %s70, %s72
      %p76 = scmp.eq.s32.totalorder %s15, 0
      %p77 = por %p75, %p76
      %p78 = scmp.ne.s32.totalorder %s70, %s72
      %p79 = scmp.eq.s32.totalorder %s20, 1
      %p80 = por %p78, %p79
      %p81 = scmp.ne.s32.totalorder %s72, %s73
      %p82 = scmp.eq.s32.totalorder %s20, 0
      %p83 = por %p81, %p82
      %p84 = scmp.ne.s32.totalorder %s72, %s73
      %p85 = scmp.eq.s32.totalorder %s21, 1
      %p86 = por %p84, %p85
      %p88 = scmp.ne.s32.totalorder %s73, %s87
      %p89 = scmp.eq.s32.totalorder %s21, 0
      %p90 = por %p88, %p89
      %s92 = sadd.s32 %s91, 1
      %p95 = scmp.eq.s32.totalorder %s15, 1
      %p96 = scmp.ne.s32.totalorder %s91, %s93
      %p97 = scmp.eq.s32.totalorder %s15, 0
      %p98 = por %p96, %p97
      %p99 = scmp.ne.s32.totalorder %s91, %s93
      %p100 = scmp.eq.s32.totalorder %s20, 1
      %p101 = por %p99, %p100
      %p102 = scmp.ne.s32.totalorder %s93, %s94
      %p103 = scmp.eq.s32.totalorder %s20, 0
      %p104 = por %p102, %p103
      %p105 = scmp.ne.s32.totalorder %s93, %s94
      %p106 = scmp.eq.s32.totalorder %s21, 1
      %p107 = por %p105, %p106
      %p109 = scmp.ne.s32.totalorder %s94, %s108
      %p110 = scmp.eq.s32.totalorder %s21, 0
      %p111 = por %p109, %p110
      %s113 = sadd.s32 %s112, 1
      %p116 = scmp.eq.s32.totalorder %s15, 1
      %p117 = scmp.ne.s32.totalorder %s112, %s114
      %p118 = scmp.eq.s32.totalorder %s15, 0
      %p119 = por %p117, %p118
      %p120 = scmp.ne.s32.totalorder %s112, %s114
      %p121 = scmp.eq.s32.totalorder %s20, 1
      %p122 = por %p120, %p121
      %p123 = scmp.ne.s32.totalorder %s114, %s115
      %p124 = scmp.eq.s32.totalorder %s20, 0
      %p125 = por %p123, %p124
      %p126 = scmp.ne.s32.totalorder %s114, %s115
      %p127 = scmp.eq.s32.totalorder %s21, 1
      %p128 = por %p126, %p127
      %p130 = scmp.ne.s32.totalorder %s115, %s129
      %p131 = scmp.eq.s32.totalorder %s21, 0
      %p132 = por %p130, %p131
      %s134 = sadd.s32 %s133, 1
      %p137 = scmp.eq.s32.totalorder %s15, 1
      %p138 = scmp.ne.s32.totalorder %s133, %s135
      %p139 = scmp.eq.s32.totalorder %s15, 0
      %p140 = por %p138, %p139
      %p141 = scmp.ne.s32.totalorder %s133, %s135
      %p142 = scmp.eq.s32.totalorder %s20, 1
      %p143 = por %p141, %p142
      %p144 = scmp.ne.s32.totalorder %s135, %s136
      %p145 = scmp.eq.s32.totalorder %s20, 0
      %p146 = por %p144, %p145
      %p147 = scmp.ne.s32.totalorder %s135, %s136
      %p148 = scmp.eq.s32.totalorder %s21, 1
      %p149 = por %p147, %p148
      %p151 = scmp.ne.s32.totalorder %s136, %s150
      %p152 = scmp.eq.s32.totalorder %s21, 0
      %p153 = por %p151, %p152
      %s154 = ssub.s32 %s15, %s22
      %p155 = scmp.eq.s32.totalorder %s154, 0
      %s157 = sadd.s32 %s156, 1
      %s158 = scalar_select %p155, %s156, %s157
      %p161 = pneg %p155
      %p162 = scmp.eq.s32.totalorder %s15, 1
      %p163 = por %p161, %p162
      %p164 = scmp.ne.s32.totalorder %s156, %s159
      %p165 = scmp.eq.s32.totalorder %s15, 0
      %p166 = por %p164, %p165
      %p167 = scmp.ne.s32.totalorder %s156, %s159
      %p168 = scmp.eq.s32.totalorder %s20, 1
      %p169 = por %p167, %p168
      %p170 = scmp.ne.s32.totalorder %s159, %s160
      %p171 = scmp.eq.s32.totalorder %s20, 0
      %p172 = por %p170, %p171
      %p173 = scmp.ne.s32.totalorder %s159, %s160
      %p174 = scmp.eq.s32.totalorder %s21, 1
      %p175 = por %p173, %p174
      %p177 = scmp.ne.s32.totalorder %s160, %s176
      %p178 = scmp.eq.s32.totalorder %s21, 0
      %p179 = por %p177, %p178
      %p180 = scmp.le.s32.totalorder 1, %s15
      %p181 = scmp.lt.s32.totalorder %s15, 3
      %p182 = pnand %p180, %p181
      %p183 = pneg %p182
      // Predicated region
      $region9: #{tpu_custom_call.1} parent=5 // pred_check
        _
      $region10: #{tpu_custom_call.1} parent=5 // pred_check_branch
        %185 = sbr.rel (%p182) target = $region12
      $region11: #{tpu_custom_call.1} parent=5 // pred_region
        %s186 = ssub.s32 %s15, 1
        // Predicated region
        $region13: #{tpu_custom_call.1} parent=11 // pred_check
          %p187 = pneg %p62
        $region14: #{tpu_custom_call.1} parent=11 // pred_check_branch
          %189 = sbr.rel (%p187) target = $region16
        $region15: #{tpu_custom_call.1} parent=11 // pred_region
          _
        $region16: #{tpu_custom_call.1} parent=11 // pred_fallthru
          _
        // Predicated region
        $region17: #{tpu_custom_call.1} parent=11 // pred_check
          %p190 = pneg %p83
        $region18: #{tpu_custom_call.1} parent=11 // pred_check_branch
          %192 = sbr.rel (%p190) target = $region20
        $region19: #{tpu_custom_call.1} parent=11 // pred_region
          _
        $region20: #{tpu_custom_call.1} parent=11 // pred_fallthru
          _
        // Predicated region
        $region21: #{tpu_custom_call.1} parent=11 // pred_check
          %p193 = pneg %p104
        $region22: #{tpu_custom_call.1} parent=11 // pred_check_branch
          %195 = sbr.rel (%p193) target = $region24
        $region23: #{tpu_custom_call.1} parent=11 // pred_region
          _
        $region24: #{tpu_custom_call.1} parent=11 // pred_fallthru
          _
        // Predicated region
        $region25: #{tpu_custom_call.1} parent=11 // pred_check
          %p196 = pneg %p125
        $region26: #{tpu_custom_call.1} parent=11 // pred_check_branch
          %198 = sbr.rel (%p196) target = $region28
        $region27: #{tpu_custom_call.1} parent=11 // pred_region
          _
        $region28: #{tpu_custom_call.1} parent=11 // pred_fallthru
          _
        // Predicated region
        $region29: #{tpu_custom_call.1} parent=11 // pred_check
          %p199 = pneg %p146
        $region30: #{tpu_custom_call.1} parent=11 // pred_check_branch
          %201 = sbr.rel (%p199) target = $region32
        $region31: #{tpu_custom_call.1} parent=11 // pred_region
          _
        $region32: #{tpu_custom_call.1} parent=11 // pred_fallthru
          _
      $region12: #{tpu_custom_call.1} parent=5 // pred_fallthru
        _
      %p202 = scmp.lt.s32.totalorder %s15, 2
      // Predicated region
      $region33: #{tpu_custom_call.1} parent=5 // pred_check
        %p203 = pneg %p202
      $region34: #{tpu_custom_call.1} parent=5 // pred_check_branch
        %205 = sbr.rel (%p203) target = $region36
      $region35: #{tpu_custom_call.1} parent=5 // pred_region
        // Predicated region
        $region37: #{tpu_custom_call.1} parent=35 // pred_check
          %p206 = pneg %p35
        $region38: #{tpu_custom_call.1} parent=35 // pred_check_branch
          %208 = sbr.rel (%p206) target = $region40
        $region39: #{tpu_custom_call.1} parent=35 // pred_region
          %s209 = sand.u32 %s25, 1
          %s210 = sand.u32 %s25, 1
          %s211 = smul.addr %s210, 48
          %s212 = scalar_lea.vmem [#allocation3], %s211
          %s213 = smul.u32 2, %s15
          %s214 = smul.addr %s213, 8
          %s215 = scalar_lea.vmem %s0, %s214
          // Predicated region
          $region41: #{tpu_custom_call.1} parent=39 // pred_check
            _
          $region42: #{tpu_custom_call.1} parent=39 // pred_check_branch
            %217 = sbr.rel (0) target = $region44
          $region43: #{tpu_custom_call.1} parent=39 // pred_region
            // Predicated region
            $region45: #{tpu_custom_call.1} parent=43 // pred_check
              _
            $region46: #{tpu_custom_call.1} parent=43 // pred_check_branch
              %219 = sbr.rel (0) target = $region48
            $region47: #{tpu_custom_call.1} parent=43 // pred_region
              loop: start=0, step=1, limit=1
              $region49: #{tpu_custom_call.1} parent=47 // loop_pre_header
                _
              $region50: #{tpu_custom_call.1} parent=47 // loop_header
                %s221 = sphi 0, %s225
                %p222 = scmp.ge.s32.totalorder %s221, 1
                %s226 = sphi %s215, %s215
                %s227 = sphi %s212, %s212
              $region51: #{tpu_custom_call.1} parent=47 // loop_header_branch
                %224 = sbr.rel (%p222) target = $region55
              $region52: #{tpu_custom_call.1} parent=47 // loop_body
                %v228 = vld [vmem:[%s226] sm:$0xff]
                %229 = vst [vmem:[%s227] sm:$0xff] %v228
                %v230 = vld [vmem:[%s226 + $0x8] sm:$0xff]
                %231 = vst [vmem:[%s227 + $0x8] sm:$0xff] %v230
                %v232 = vld [vmem:[%s226 + $0x20] sm:$0xff]
                %233 = vst [vmem:[%s227 + $0x10] sm:$0xff] %v232
                %v234 = vld [vmem:[%s226 + $0x28] sm:$0xff]
                %235 = vst [vmem:[%s227 + $0x18] sm:$0xff] %v234
                %v236 = vld [vmem:[%s226 + $0x40] sm:$0xff]
                %237 = vst [vmem:[%s227 + $0x20] sm:$0xff] %v236
                %v238 = vld [vmem:[%s226 + $0x48] sm:$0xff]
                %239 = vst [vmem:[%s227 + $0x28] sm:$0xff] %v238
              $region53: #{tpu_custom_call.1} parent=47 // loop_footer
                %s225 = sadd.s32 1, %s221
              $region54: #{tpu_custom_call.1} parent=47 // loop_footer_branch
                %220 = sbr.rel target = $region50
              $region55: #{tpu_custom_call.1} parent=47 // loop_exit
                _
            $region48: #{tpu_custom_call.1} parent=43 // pred_fallthru
              _
            // Predicated region
            $region56: #{tpu_custom_call.1} parent=43 // pred_check
              _
            $region57: #{tpu_custom_call.1} parent=43 // pred_check_branch
              %241 = sbr.rel target = $region59
            $region58: #{tpu_custom_call.1} parent=43 // pred_region
              _
            $region59: #{tpu_custom_call.1} parent=43 // pred_fallthru
              _
          $region44: #{tpu_custom_call.1} parent=39 // pred_fallthru
            _
          %242 = vnop
        $region40: #{tpu_custom_call.1} parent=35 // pred_fallthru
          _
      $region36: #{tpu_custom_call.1} parent=5 // pred_fallthru
        _
      %p243 = scmp.le.s32.totalorder 1, %s15
      %p244 = scmp.lt.s32.totalorder %s15, 3
      %p245 = pnand %p243, %p244
      %p246 = pneg %p245
      // Predicated region
      $region60: #{tpu_custom_call.1} parent=5 // pred_check
        _
      $region61: #{tpu_custom_call.1} parent=5 // pred_check_branch
        %248 = sbr.rel (%p245) target = $region63
      $region62: #{tpu_custom_call.1} parent=5 // pred_region
        %s249 = ssub.s32 %s15, 1
        %s250 = sand.u32 %s28, 1
        %s251 = sand.u32 %s28, 1
        %s252 = smul.addr %s251, 48
        %s253 = scalar_lea.vmem [#allocation3], %s252
        // Predicated region
        $region64: #{tpu_custom_call.1} parent=62 // pred_check
          %p254 = pneg %p41
        $region65: #{tpu_custom_call.1} parent=62 // pred_check_branch
          %256 = sbr.rel (%p254) target = $region67
        $region66: #{tpu_custom_call.1} parent=62 // pred_region
          _
        $region67: #{tpu_custom_call.1} parent=62 // pred_fallthru
          _
        %s257 = sand.u32 %s28, 1
        %s258 = sand.u32 %s28, 1
        %s259 = smul.addr %s258, 48
        %s260 = scalar_lea.vmem [#allocation3], %s259
        %p261 = pneg %p41
        %p262 = pneg %p38
        %p263 = pneg %p62
        %p264 = pneg %p59
        %p265 = pneg %p83
        %p266 = pneg %p80
        %p267 = pneg %p104
        %p268 = pneg %p101
        %p269 = pneg %p125
        %p270 = pneg %p122
        %p271 = pneg %p146
        %p272 = pneg %p143
        %p273 = pneg %p172
        %p274 = pneg %p169
        %s275 = sand.u32 %s159, 1
        %s276 = scalar_lea.sflag [#allocation5], %s275
        %s277 = sand.u32 %s159, 1
        %s278 = smul.addr %s277, 96
        %s279 = scalar_lea.vmem [#allocation4], %s278
        %s280 = smul.u32 2, %s20
        %s281 = smul.u32 2, %s20
        %v282 = vld [vmem:[%s1] sm:$0xff]
        %v283 = vld [vmem:[%s1 + $0x8] sm:$0xff]
        %v284 = vld [vmem:[%s1 + $0x10] sm:$0xff]
        %v285 = vld [vmem:[%s1 + $0x18] sm:$0xff]
        %v286 = vld [vmem:[%s1 + $0x20] sm:$0xff]
        %v287 = vld [vmem:[%s1 + $0x28] sm:$0xff]
        %v288 = vld [vmem:[%s1 + $0x30] sm:$0xff]
        %v289 = vld [vmem:[%s1 + $0x38] sm:$0xff]
        %v290 = vld [vmem:[%s1 + $0x40] sm:$0xff]
        %v291 = vld [vmem:[%s1 + $0x48] sm:$0xff]
        %v292 = vld [vmem:[%s1 + $0x50] sm:$0xff]
        %v293 = vld [vmem:[%s1 + $0x58] sm:$0xff]
        %v294 = vld [vmem:[%s253] sm:$0xff]
        %v295 = vld [vmem:[%s253 + $0x8] sm:$0xff]
        %v296 = vld [vmem:[%s253 + $0x10] sm:$0xff]
        %v297 = vld [vmem:[%s253 + $0x18] sm:$0xff]
        %v298 = vld [vmem:[%s253 + $0x20] sm:$0x1]
        %v299 = vld [vmem:[%s253 + $0x28] sm:$0x1]
        %vm300 = vcmask 138240
        %v302 = vsel %vm300, %v282, 0
        %v305 = vsel %vm300, %v283, 0
        %v308 = vsel %vm300, %v284, 0
        %v311 = vsel %vm300, %v285, 0
        %v314 = vsel %vm300, %v286, 0
        %v317 = vsel %vm300, %v287, 0
        %v320 = vsel %vm300, %v288, 0
        %v323 = vsel %vm300, %v289, 0
        %v326 = vsel %vm300, %v290, 0
        %v329 = vsel %vm300, %v291, 0
        %v332 = vsel %vm300, %v292, 0
        %v335 = vsel %vm300, %v293, 0
        %vm337 = vcmask 1040384
        %v339 = vsel %vm337, %v298, 0
        %v342 = vsel %vm337, %v299, 0
        %344 = vmatprep.subr.mxu0 0.0
        %345 = vmatpush1.msra.mxu0 0.0
        %346 = vmatprep.subr.mxu0 0.0
        %347 = vmatpush1.msra.mxu0 0.0
        %348 = vmatprep.subr.mxu0 0.0
        %349 = vmatpush1.msra.mxu0 0.0
        %350 = vmatprep.subr.mxu0 0.0
        %351 = vmatpush1.msra.mxu0 0.0
        %352 = vmatprep.subr.mxu0 0.0
        %353 = vmatpush1.msra.mxu0 0.0
        %354 = vmatprep.subr.mxu0 0.0
        %355 = vmatpush1.msra.mxu0 0.0
        %356 = vmatprep.subr.mxu0 0.0
        %357 = vmatpush1.msra.mxu0 0.0
        %358 = vmatprep.subr.mxu0 0.0
        %359 = vmatpush1.msra.mxu0 0.0
        %360 = vmatprep.subr.mxu0 0.0
        %361 = vmatpush1.msra.mxu0 0.0
        %362 = vmatprep.subr.mxu0 0.0
        %363 = vmatpush1.msra.mxu0 0.0
        %364 = vmatprep.subr.mxu0 0.0
        %365 = vmatpush1.msra.mxu0 0.0
        %366 = vmatprep.subr.mxu0 0.0
        %367 = vmatpush1.msra.mxu0 0.0
        %368 = vmatprep.subr.mxu0 0.0
        %369 = vmatpush1.msra.mxu0 0.0
        %370 = vmatprep.subr.mxu0 %v342
        %371 = vmatpush1.msra.mxu0 %v339
        %372 = vmatprep.subr.mxu0 %v297
        %373 = vmatpush1.msra.mxu0 %v296
        %374 = vmatprep.subr.mxu0 %v295
        %375 = vmatpush1.msra.mxu0 %v294
        %376 = vmatprep.subr.mxu0 0.0
        %377 = vmatpush2.msra.mxu0 0.0
        %378 = vmatprep.subr.mxu0 0.0
        %379 = vmatpush2.msra.mxu0 0.0
        %380 = vmatprep.subr.mxu0 0.0
        %381 = vmatpush2.msra.mxu0 0.0
        %382 = vmatprep.subr.mxu0 0.0
        %383 = vmatpush2.msra.mxu0 0.0
        %384 = vmatprep.subr.mxu0 0.0
        %385 = vmatpush2.msra.mxu0 0.0
        %386 = vmatprep.subr.mxu0 0.0
        %387 = vmatpush2.msra.mxu0 0.0
        %388 = vmatprep.subr.mxu0 0.0
        %389 = vmatpush2.msra.mxu0 0.0
        %390 = vmatprep.subr.mxu0 0.0
        %391 = vmatpush2.msra.mxu0 0.0
        %392 = vmatprep.subr.mxu0 0.0
        %393 = vmatpush2.msra.mxu0 0.0
        %394 = vmatprep.subr.mxu0 0.0
        %395 = vmatpush2.msra.mxu0 0.0
        %396 = vmatprep.subr.mxu0 0.0
        %397 = vmatpush2.msra.mxu0 0.0
        %398 = vmatprep.subr.mxu0 0.0
        %399 = vmatpush2.msra.mxu0 0.0
        %400 = vmatprep.subr.mxu0 0.0
        %401 = vmatpush2.msra.mxu0 0.0
        %402 = vmatprep.subr.mxu0 0.0
        %403 = vmatpush2.msra.mxu0 0.0
        %404 = vmatprep.subr.mxu0 0.0
        %405 = vmatpush2.msra.mxu0 0.0
        %406 = vmatprep.subr.mxu0 0.0
        %407 = vmatpush2.msra.mxu0 0.0
        %408 = vmatprep.mubr.f32.mxu0 0.0
        %409 = vmatmul.mubr.f32.gmra.mxu0 %v302
        %v410 = vpop.f32.mrf.mxu0
        %v411 = vadd.f32 0.0, %v410
        %v412 = vpop.f32.mrf.mxu0
        %v413 = vadd.f32 0.0, %v412
        %414 = vmatprep.mubr.f32.mxu0 0.0
        %415 = vmatmul.mubr.f32.gmra.mxu0 %v305
        %v416 = vpop.f32.mrf.mxu0
        %v417 = vadd.f32 0.0, %v416
        %v418 = vpop.f32.mrf.mxu0
        %v419 = vadd.f32 0.0, %v418
        %420 = vmatprep.mubr.f32.mxu0 0.0
        %421 = vmatmul.mubr.f32.gmra.mxu0 %v308
        %v422 = vpop.f32.mrf.mxu0
        %v423 = vadd.f32 0.0, %v422
        %v424 = vpop.f32.mrf.mxu0
        %v425 = vadd.f32 0.0, %v424
        %426 = vmatprep.mubr.f32.mxu0 0.0
        %427 = vmatmul.mubr.f32.gmra.mxu0 %v311
        %v428 = vpop.f32.mrf.mxu0
        %v429 = vadd.f32 0.0, %v428
        %v430 = vpop.f32.mrf.mxu0
        %v431 = vadd.f32 0.0, %v430
        %432 = vmatprep.mubr.f32.mxu0 0.0
        %433 = vmatmul.mubr.f32.gmra.mxu0 %v314
        %v434 = vpop.f32.mrf.mxu0
        %v435 = vadd.f32 0.0, %v434
        %v436 = vpop.f32.mrf.mxu0
        %v437 = vadd.f32 0.0, %v436
        %438 = vmatprep.mubr.f32.mxu0 0.0
        %439 = vmatmul.mubr.f32.gmra.mxu0 %v317
        %v440 = vpop.f32.mrf.mxu0
        %v441 = vadd.f32 0.0, %v440
        %v442 = vpop.f32.mrf.mxu0
        %v443 = vadd.f32 0.0, %v442
        %444 = vmatprep.mubr.f32.mxu0 0.0
        %445 = vmatmul.mubr.f32.gmra.mxu0 %v320
        %v446 = vpop.f32.mrf.mxu0
        %v447 = vadd.f32 0.0, %v446
        %v448 = vpop.f32.mrf.mxu0
        %v449 = vadd.f32 0.0, %v448
        %450 = vmatprep.mubr.f32.mxu0 0.0
        %451 = vmatmul.mubr.f32.gmra.mxu0 %v323
        %v452 = vpop.f32.mrf.mxu0
        %v453 = vadd.f32 0.0, %v452
        %v454 = vpop.f32.mrf.mxu0
        %v455 = vadd.f32 0.0, %v454
        %456 = vmatprep.mubr.f32.mxu0 0.0
        %457 = vmatmul.mubr.f32.gmra.mxu0 %v326
        %v458 = vpop.f32.mrf.mxu0
        %v459 = vadd.f32 0.0, %v458
        %v460 = vpop.f32.mrf.mxu0
        %v461 = vadd.f32 0.0, %v460
        %462 = vmatprep.mubr.f32.mxu0 0.0
        %463 = vmatmul.mubr.f32.gmra.mxu0 %v329
        %v464 = vpop.f32.mrf.mxu0
        %v465 = vadd.f32 0.0, %v464
        %v466 = vpop.f32.mrf.mxu0
        %v467 = vadd.f32 0.0, %v466
        %468 = vmatprep.mubr.f32.mxu0 0.0
        %469 = vmatmul.mubr.f32.gmra.mxu0 %v332
        %v470 = vpop.f32.mrf.mxu0
        %v471 = vadd.f32 0.0, %v470
        %v472 = vpop.f32.mrf.mxu0
        %v473 = vadd.f32 0.0, %v472
        %474 = vmatprep.mubr.f32.mxu0 0.0
        %475 = vmatmul.mubr.f32.gmra.mxu0 %v335
        %v476 = vpop.f32.mrf.mxu0
        %v477 = vadd.f32 0.0, %v476
        %v478 = vpop.f32.mrf.mxu0
        %v479 = vadd.f32 0.0, %v478
        %480 = vdwg.mxu0
        %v481 = vmax.f32 %v411, 0.0
        %v482 = vmax.f32 %v413, 0.0
        %v483 = vmax.f32 %v417, 0.0
        %v484 = vmax.f32 %v419, 0.0
        %v485 = vmax.f32 %v423, 0.0
        %v486 = vmax.f32 %v425, 0.0
        %v487 = vmax.f32 %v429, 0.0
        %v488 = vmax.f32 %v431, 0.0
        %v489 = vmax.f32 %v435, 0.0
        %v490 = vmax.f32 %v437, 0.0
        %v491 = vlaneseq
        %v492 = vand.u32 %v491, 127
        %v493 = vadd.s32 %v492, 128
        %vm494 = vcmp.lt.s32.totalorder %v492, 0
        %v495 = vsub.s32 0, %v492
        %v496 = vsel %vm494, %v495, %v492
        %v497 = vshrl.u32 %v496, 8
        %v498 = vand.u32 %v496, 255
        %v499 = vsub.s32 0, %v498
        %v500 = vsel %vm494, %v499, %v498
        %vm501 = vcmp.lt.s32.totalorder %v493, 0
        %v502 = vsub.s32 0, %v493
        %v503 = vsel %vm501, %v502, %v493
        %v504 = vshrl.u32 %v503, 8
        %v505 = vand.u32 %v503, 255
        %v506 = vsub.s32 0, %v505
        %v507 = vsel %vm501, %v506, %v505
        %vm508 = vcmp.ne.s32.totalorder %v500, 0
        %vm509 = vcmp.ne.s32.totalorder %v507, 0
        %vm510 = vcmp.lt.s32.totalorder %v500, 0
        %vm511 = vcmp.lt.s32.totalorder %v507, 0
        %vm512 = vmand %vm510, %vm508
        %vm513 = vmand %vm511, %vm509
        %v514 = vadd.s32 %v500, 256
        %v515 = vadd.s32 %v507, 256
        %v516 = vsel %vm512, %v514, %v500
        %v517 = vsel %vm513, %v515, %v507
        %vm518 = vcmp.ge.s32.totalorder %v516, 16
        %vm519 = vcmp.ge.s32.totalorder %v517, 16
        %520 = vrot.lane.b32.xlu0 %v481, 16
        %v521 = vpop.permute.xlu0 %520
        %522 = vrot.lane.b32.xlu0 %v482, 16
        %v523 = vpop.permute.xlu0 %522
        %vm524 = vcmp.lt.s32.totalorder %v492, 16
        %v525 = vsel %vm524, %v521, %v523
        %v526 = vsel %vm524, %v523, %v521
        %v527 = vsel %vm518, 1, 0
        %v528 = vsel %vm519, 1, 0
        %vm529 = vcmp.eq.s32.totalorder %v527, 1
        %vm530 = vcmp.eq.s32.totalorder %v528, 1
        %v531 = vsel %vm529, %v526, 0.0
        %v532 = vsel %vm530, %v525, 0.0
        %vm533 = vcmp.lt.s32.totalorder %v516, 240
        %vm534 = vcmp.lt.s32.totalorder %v517, 240
        %535 = vrot.lane.b32.xlu0 %v481, 112
        %v536 = vpop.permute.xlu0 %535
        %537 = vrot.lane.b32.xlu0 %v482, 112
        %v538 = vpop.permute.xlu0 %537
        %vm539 = vcmp.lt.s32.totalorder %v492, 112
        %v540 = vsel %vm539, %v536, %v538
        %v541 = vsel %vm539, %v538, %v536
        %v542 = vsel %vm533, 1, 0
        %v543 = vsel %vm534, 1, 0
        %vm544 = vcmp.eq.s32.totalorder %v542, 1
        %vm545 = vcmp.eq.s32.totalorder %v543, 1
        %v546 = vsel %vm544, %v540, 0.0
        %v547 = vsel %vm545, %v541, 0.0
        %548 = vst [vmem:[#allocation2] sm:$0xff] %v531
        %549 = vst [vmem:[#allocation2 + $0x8] sm:$0xff] %v532
        %550 = vst [vmem:[#allocation2 + $0x10] sm:$0xff] %v481
        %551 = vst [vmem:[#allocation2 + $0x18] sm:$0xff] %v482
        %552 = vst [vmem:[#allocation2 + $0x20] sm:$0xff] %v546
        %553 = vst [vmem:[#allocation2 + $0x28] sm:$0xff] %v547
        %vm554 = vcmp.ge.s32.totalorder %v516, 32
        %vm555 = vcmp.ge.s32.totalorder %v517, 32
        %556 = vrot.lane.b32.xlu0 %v483, 32
        %v557 = vpop.permute.xlu0 %556
        %558 = vrot.lane.b32.xlu0 %v484, 32
        %v559 = vpop.permute.xlu0 %558
        %vm560 = vcmp.lt.s32.totalorder %v492, 32
        %v561 = vsel %vm560, %v557, %v559
        %v562 = vsel %vm560, %v559, %v557
        %v563 = vsel %vm554, 1, 0
        %v564 = vsel %vm555, 1, 0
        %vm565 = vcmp.eq.s32.totalorder %v563, 1
        %vm566 = vcmp.eq.s32.totalorder %v564, 1
        %v567 = vsel %vm565, %v562, 0.0
        %v568 = vsel %vm566, %v561, 0.0
        %vm569 = vcmp.lt.s32.totalorder %v516, 224
        %vm570 = vcmp.lt.s32.totalorder %v517, 224
        %571 = vrot.lane.b32.xlu0 %v483, 96
        %v572 = vpop.permute.xlu0 %571
        %573 = vrot.lane.b32.xlu0 %v484, 96
        %v574 = vpop.permute.xlu0 %573
        %vm575 = vcmp.lt.s32.totalorder %v492, 96
        %v576 = vsel %vm575, %v572, %v574
        %v577 = vsel %vm575, %v574, %v572
        %v578 = vsel %vm569, 1, 0
        %v579 = vsel %vm570, 1, 0
        %vm580 = vcmp.eq.s32.totalorder %v578, 1
        %vm581 = vcmp.eq.s32.totalorder %v579, 1
        %v582 = vsel %vm580, %v576, 0.0
        %v583 = vsel %vm581, %v577, 0.0
        %584 = vst [vmem:[#allocation2 + $0x30] sm:$0xff] %v567
        %585 = vst [vmem:[#allocation2 + $0x38] sm:$0xff] %v568
        %586 = vst [vmem:[#allocation2 + $0x40] sm:$0xff] %v483
        %587 = vst [vmem:[#allocation2 + $0x48] sm:$0xff] %v484
        %588 = vst [vmem:[#allocation2 + $0x50] sm:$0xff] %v582
        %589 = vst [vmem:[#allocation2 + $0x58] sm:$0xff] %v583
        %vm590 = vcmp.ge.s32.totalorder %v516, 48
        %vm591 = vcmp.ge.s32.totalorder %v517, 48
        %592 = vrot.lane.b32.xlu0 %v485, 48
        %v593 = vpop.permute.xlu0 %592
        %594 = vrot.lane.b32.xlu0 %v486, 48
        %v595 = vpop.permute.xlu0 %594
        %vm596 = vcmp.lt.s32.totalorder %v492, 48
        %v597 = vsel %vm596, %v593, %v595
        %v598 = vsel %vm596, %v595, %v593
        %v599 = vsel %vm590, 1, 0
        %v600 = vsel %vm591, 1, 0
        %vm601 = vcmp.eq.s32.totalorder %v599, 1
        %vm602 = vcmp.eq.s32.totalorder %v600, 1
        %v603 = vsel %vm601, %v598, 0.0
        %v604 = vsel %vm602, %v597, 0.0
        %vm605 = vcmp.lt.s32.totalorder %v516, 208
        %vm606 = vcmp.lt.s32.totalorder %v517, 208
        %607 = vrot.lane.b32.xlu0 %v485, 80
        %v608 = vpop.permute.xlu0 %607
        %609 = vrot.lane.b32.xlu0 %v486, 80
        %v610 = vpop.permute.xlu0 %609
        %vm611 = vcmp.lt.s32.totalorder %v492, 80
        %v612 = vsel %vm611, %v608, %v610
        %v613 = vsel %vm611, %v610, %v608
        %v614 = vsel %vm605, 1, 0
        %v615 = vsel %vm606, 1, 0
        %vm616 = vcmp.eq.s32.totalorder %v614, 1
        %vm617 = vcmp.eq.s32.totalorder %v615, 1
        %v618 = vsel %vm616, %v612, 0.0
        %v619 = vsel %vm617, %v613, 0.0
        %620 = vst [vmem:[#allocation2 + $0x60] sm:$0xff] %v603
        %621 = vst [vmem:[#allocation2 + $0x68] sm:$0xff] %v604
        %622 = vst [vmem:[#allocation2 + $0x70] sm:$0xff] %v485
        %623 = vst [vmem:[#allocation2 + $0x78] sm:$0xff] %v486
        %624 = vst [vmem:[#allocation2 + $0x80] sm:$0xff] %v618
        %625 = vst [vmem:[#allocation2 + $0x88] sm:$0xff] %v619
        %vm626 = vcmp.ge.s32.totalorder %v516, 64
        %vm627 = vcmp.ge.s32.totalorder %v517, 64
        %628 = vrot.lane.b32.xlu0 %v487, 64
        %v629 = vpop.permute.xlu0 %628
        %630 = vrot.lane.b32.xlu0 %v488, 64
        %v631 = vpop.permute.xlu0 %630
        %vm632 = vcmp.lt.s32.totalorder %v492, 64
        %v633 = vsel %vm632, %v629, %v631
        %v634 = vsel %vm632, %v631, %v629
        %v635 = vsel %vm626, 1, 0
        %v636 = vsel %vm627, 1, 0
        %vm637 = vcmp.eq.s32.totalorder %v635, 1
        %vm638 = vcmp.eq.s32.totalorder %v636, 1
        %v639 = vsel %vm637, %v634, 0.0
        %v640 = vsel %vm638, %v633, 0.0
        %vm641 = vcmp.lt.s32.totalorder %v516, 192
        %vm642 = vcmp.lt.s32.totalorder %v517, 192
        %v643 = vsel %vm641, 1, 0
        %v644 = vsel %vm642, 1, 0
        %vm645 = vcmp.eq.s32.totalorder %v643, 1
        %vm646 = vcmp.eq.s32.totalorder %v644, 1
        %v647 = vsel %vm645, %v633, 0.0
        %v648 = vsel %vm646, %v634, 0.0
        %649 = vst [vmem:[#allocation2 + $0x90] sm:$0xff] %v639
        %650 = vst [vmem:[#allocation2 + $0x98] sm:$0xff] %v640
        %651 = vst [vmem:[#allocation2 + $0xa0] sm:$0xff] %v487
        %652 = vst [vmem:[#allocation2 + $0xa8] sm:$0xff] %v488
        %653 = vst [vmem:[#allocation2 + $0xb0] sm:$0xff] %v647
        %654 = vst [vmem:[#allocation2 + $0xb8] sm:$0xff] %v648
        %v655 = vld [vmem:[%s2] sm:$0xff]
        %v656 = vld [vmem:[%s2 + $0x8] sm:$0xff]
        %v657 = vld [vmem:[%s2 + $0x10] sm:$0xff]
        %v658 = vld [vmem:[%s2 + $0x18] sm:$0xff]
        %v659 = vld [vmem:[#allocation2] sm:$0xff]
        %v660 = vld [vmem:[#allocation2 + $0x8] sm:$0xff]
        %v661 = vld [vmem:[#allocation2 + $0x10] sm:$0xff]
        %v662 = vld [vmem:[#allocation2 + $0x18] sm:$0xff]
        %v663 = vld [vmem:[#allocation2 + $0x20] sm:$0xff]
        %v664 = vld [vmem:[#allocation2 + $0x28] sm:$0xff]
        %v665 = vld [vmem:[#allocation2 + $0x30] sm:$0xff]
        %v666 = vld [vmem:[#allocation2 + $0x38] sm:$0xff]
        %v667 = vld [vmem:[#allocation2 + $0x40] sm:$0xff]
        %v668 = vld [vmem:[#allocation2 + $0x48] sm:$0xff]
        %v669 = vld [vmem:[#allocation2 + $0x50] sm:$0xff]
        %v670 = vld [vmem:[#allocation2 + $0x58] sm:$0xff]
        %v671 = vld [vmem:[#allocation2 + $0x60] sm:$0xff]
        %v672 = vld [vmem:[#allocation2 + $0x68] sm:$0xff]
        %v673 = vld [vmem:[#allocation2 + $0x70] sm:$0xff]
        %v674 = vld [vmem:[#allocation2 + $0x78] sm:$0xff]
        %v675 = vld [vmem:[#allocation2 + $0x80] sm:$0xff]
        %v676 = vld [vmem:[#allocation2 + $0x88] sm:$0xff]
        %v677 = vld [vmem:[#allocation2 + $0x90] sm:$0xff]
        %v678 = vld [vmem:[#allocation2 + $0x98] sm:$0xff]
        %v679 = vld [vmem:[#allocation2 + $0xa0] sm:$0xff]
        %v680 = vld [vmem:[#allocation2 + $0xa8] sm:$0xff]
        %v681 = vld [vmem:[#allocation2 + $0xb0] sm:$0xff]
        %v682 = vld [vmem:[#allocation2 + $0xb8] sm:$0xff]
        %v683 = vld [vmem:[%s3] sm:$0xff]
        %v684 = vld [vmem:[%s3 + $0x8] sm:$0xff]
        %v685 = vld [vmem:[%s3 + $0x10] sm:$0xff]
        %v686 = vld [vmem:[%s3 + $0x18] sm:$0xff]
        %688 = vset.pattern.permute.xlu0 0
        %689 = vperm.xlu0 %688, %v683
        %v690 = vpop.permute.xlu0 %689
        %693 = vset.pattern.permute.xlu0 0
        %694 = vperm.xlu0 %693, %v684
        %v695 = vpop.permute.xlu0 %694
        %698 = vset.pattern.permute.xlu0 0
        %699 = vperm.xlu0 %698, %v685
        %v700 = vpop.permute.xlu0 %699
        %703 = vset.pattern.permute.xlu0 0
        %704 = vperm.xlu0 %703, %v686
        %v705 = vpop.permute.xlu0 %704
        %vm707 = vcmask 785408
        %v709 = vsel %vm707, %v655, 0
        %v712 = vsel %vm707, %v656, 0
        %v715 = vsel %vm707, %v657, 0
        %v718 = vsel %vm707, %v658, 0
        %720 = vmatprep.subr.mxu0 0.0
        %721 = vmatpush1.msra.mxu0 0.0
        %722 = vmatprep.subr.mxu0 0.0
        %723 = vmatpush1.msra.mxu0 0.0
        %724 = vmatprep.subr.mxu0 0.0
        %725 = vmatpush1.msra.mxu0 0.0
        %726 = vmatprep.subr.mxu0 0.0
        %727 = vmatpush1.msra.mxu0 0.0
        %728 = vmatprep.subr.mxu0 %v682
        %729 = vmatpush1.msra.mxu0 %v681
        %730 = vmatprep.subr.mxu0 %v680
        %731 = vmatpush1.msra.mxu0 %v679
        %732 = vmatprep.subr.mxu0 %v678
        %733 = vmatpush1.msra.mxu0 %v677
        %734 = vmatprep.subr.mxu0 %v676
        %735 = vmatpush1.msra.mxu0 %v675
        %736 = vmatprep.subr.mxu0 %v674
        %737 = vmatpush1.msra.mxu0 %v673
        %738 = vmatprep.subr.mxu0 %v672
        %739 = vmatpush1.msra.mxu0 %v671
        %740 = vmatprep.subr.mxu0 %v670
        %741 = vmatpush1.msra.mxu0 %v669
        %742 = vmatprep.subr.mxu0 %v668
        %743 = vmatpush1.msra.mxu0 %v667
        %744 = vmatprep.subr.mxu0 %v666
        %745 = vmatpush1.msra.mxu0 %v665
        %746 = vmatprep.subr.mxu0 %v664
        %747 = vmatpush1.msra.mxu0 %v663
        %748 = vmatprep.subr.mxu0 %v662
        %749 = vmatpush1.msra.mxu0 %v661
        %750 = vmatprep.subr.mxu0 %v660
        %751 = vmatpush1.msra.mxu0 %v659
        %752 = vmatprep.subr.mxu0 0.0
        %753 = vmatpush2.msra.mxu0 0.0
        %754 = vmatprep.subr.mxu0 0.0
        %755 = vmatpush2.msra.mxu0 0.0
        %756 = vmatprep.subr.mxu0 0.0
        %757 = vmatpush2.msra.mxu0 0.0
        %758 = vmatprep.subr.mxu0 0.0
        %759 = vmatpush2.msra.mxu0 0.0
        %760 = vmatprep.subr.mxu0 0.0
        %761 = vmatpush2.msra.mxu0 0.0
        %762 = vmatprep.subr.mxu0 0.0
        %763 = vmatpush2.msra.mxu0 0.0
        %764 = vmatprep.subr.mxu0 0.0
        %765 = vmatpush2.msra.mxu0 0.0
        %766 = vmatprep.subr.mxu0 0.0
        %767 = vmatpush2.msra.mxu0 0.0
        %768 = vmatprep.subr.mxu0 0.0
        %769 = vmatpush2.msra.mxu0 0.0
        %770 = vmatprep.subr.mxu0 0.0
        %771 = vmatpush2.msra.mxu0 0.0
        %772 = vmatprep.subr.mxu0 0.0
        %773 = vmatpush2.msra.mxu0 0.0
        %774 = vmatprep.subr.mxu0 0.0
        %775 = vmatpush2.msra.mxu0 0.0
        %776 = vmatprep.subr.mxu0 0.0
        %777 = vmatpush2.msra.mxu0 0.0
        %778 = vmatprep.subr.mxu0 0.0
        %779 = vmatpush2.msra.mxu0 0.0
        %780 = vmatprep.subr.mxu0 0.0
        %781 = vmatpush2.msra.mxu0 0.0
        %782 = vmatprep.subr.mxu0 0.0
        %783 = vmatpush2.msra.mxu0 0.0
        %784 = vmatprep.mubr.f32.mxu0 0.0
        %785 = vmatmul.mubr.f32.gmra.mxu0 %v709
        %v786 = vpop.f32.mrf.mxu0
        %v787 = vadd.f32 %v690, %v786
        %v788 = vpop.f32.mrf.mxu0
        %v789 = vadd.f32 %v690, %v788
        %790 = vmatprep.mubr.f32.mxu0 0.0
        %791 = vmatmul.mubr.f32.gmra.mxu0 %v712
        %v792 = vpop.f32.mrf.mxu0
        %v793 = vadd.f32 %v695, %v792
        %v794 = vpop.f32.mrf.mxu0
        %v795 = vadd.f32 %v695, %v794
        %796 = vmatprep.mubr.f32.mxu0 0.0
        %797 = vmatmul.mubr.f32.gmra.mxu0 %v715
        %v798 = vpop.f32.mrf.mxu0
        %v799 = vadd.f32 %v700, %v798
        %v800 = vpop.f32.mrf.mxu0
        %v801 = vadd.f32 %v700, %v800
        %802 = vmatprep.mubr.f32.mxu0 0.0
        %803 = vmatmul.mubr.f32.gmra.mxu0 %v718
        %v804 = vpop.f32.mrf.mxu0
        %v805 = vadd.f32 %v705, %v804
        %v806 = vpop.f32.mrf.mxu0
        %v807 = vadd.f32 %v705, %v806
        %808 = vdwg.mxu0
        %809 = vrot.lane.b32.xlu0 %v489, 16
        %v810 = vpop.permute.xlu0 %809
        %811 = vrot.lane.b32.xlu0 %v490, 16
        %v812 = vpop.permute.xlu0 %811
        %v813 = vsel %vm524, %v810, %v812
        %v814 = vsel %vm524, %v812, %v810
        %v815 = vsel %vm529, %v814, 0.0
        %v816 = vsel %vm530, %v813, 0.0
        %817 = vrot.lane.b32.xlu0 %v489, 112
        %v818 = vpop.permute.xlu0 %817
        %819 = vrot.lane.b32.xlu0 %v490, 112
        %v820 = vpop.permute.xlu0 %819
        %v821 = vsel %vm539, %v818, %v820
        %v822 = vsel %vm539, %v820, %v818
        %v823 = vsel %vm544, %v821, 0.0
        %v824 = vsel %vm545, %v822, 0.0
        %v825 = vmax.f32 %v815, %v489
        %v826 = vmax.f32 %v816, %v490
        %v827 = vmax.f32 %v825, %v823
        %v828 = vmax.f32 %v826, %v824
        %v829 = vld [vmem:[%s4] sm:$0xff]
        %831 = vset.pattern.permute.xlu0 0
        %832 = vperm.xlu0 %831, %v829
        %v833 = vpop.permute.xlu0 %832
        %v835 = vmul.f32 %v827, %v833
        %v836 = vmul.f32 %v828, %v833
        %v837 = vld [vmem:[%s5] sm:$0xff]
        %839 = vset.pattern.permute.xlu0 0
        %840 = vperm.xlu0 %839, %v837
        %v841 = vpop.permute.xlu0 %840
        %v843 = vadd.f32 %v835, %v841
        %v844 = vadd.f32 %v836, %v841
        %v845 = vadd.f32 %v787, %v447
        %v846 = vadd.f32 %v789, %v449
        %v847 = vadd.f32 %v793, %v453
        %v848 = vadd.f32 %v795, %v455
        %v849 = vadd.f32 %v799, %v459
        %v850 = vadd.f32 %v801, %v461
        %v851 = vadd.f32 %v805, %v465
        %v852 = vadd.f32 %v807, %v467
        %853 = vst [vmem:[%s279] sm:$0xff] %v845
        %854 = vst [vmem:[%s279 + $0x8] sm:$0xff] %v846
        %855 = vst [vmem:[%s279 + $0x10] sm:$0xff] %v847
        %856 = vst [vmem:[%s279 + $0x18] sm:$0xff] %v848
        %857 = vst [vmem:[%s279 + $0x20] sm:$0xff] %v849
        %858 = vst [vmem:[%s279 + $0x28] sm:$0xff] %v850
        %859 = vst [vmem:[%s279 + $0x30] sm:$0xff] %v851
        %860 = vst [vmem:[%s279 + $0x38] sm:$0xff] %v852
        %v861 = vadd.f32 %v843, %v471
        %v862 = vadd.f32 %v844, %v473
        %863 = vst [vmem:[%s279 + $0x40] sm:$0xff] %v861
        %864 = vst [vmem:[%s279 + $0x48] sm:$0xff] %v862
        %v865 = vadd.f32 %v441, %v477
        %v866 = vadd.f32 %v443, %v479
        %867 = vst [vmem:[%s279 + $0x50] sm:$0xff] %v865
        %868 = vst [vmem:[%s279 + $0x58] sm:$0xff] %v866
        %s869 = sand.u32 %s159, 1
        %s870 = scalar_lea.sflag [#allocation5], %s869
        %s871 = sand.u32 %s159, 1
        %s872 = smul.addr %s871, 96
        %s873 = scalar_lea.vmem [#allocation4], %s872
        // Predicated region
        $region68: #{tpu_custom_call.1} parent=62 // pred_check
          %p874 = pneg %p169
        $region69: #{tpu_custom_call.1} parent=62 // pred_check_branch
          %876 = sbr.rel (%p874) target = $region71
        $region70: #{tpu_custom_call.1} parent=62 // pred_region
          %s877 = smul.u32 2, %s20
          %s879 = ssub.s32 1536, 1536
          %880 = vsyncadd %s870, %s879
          %s881 = smul.addr %s877, 128
          %s882 = scalar_lea.hbm %s6, %s881
          %s883 = sshll.u32 %s873, 4
          %s884 = int_to_ptr.vmem [resolvable:$true] %s883
          %889 = dma.vmem_to_hbm [thread:$0]  %s884, 1536, %s882, %s870, 256, 512, 16
        $region71: #{tpu_custom_call.1} parent=62 // pred_fallthru
          _
      $region63: #{tpu_custom_call.1} parent=5 // pred_fallthru
        _
      %p890 = scmp.le.s32.totalorder 2, %s15
      // Predicated region
      $region72: #{tpu_custom_call.1} parent=5 // pred_check
        %p891 = pneg %p890
      $region73: #{tpu_custom_call.1} parent=5 // pred_check_branch
        %893 = sbr.rel (%p891) target = $region75
      $region74: #{tpu_custom_call.1} parent=5 // pred_region
        %s894 = ssub.s32 %s15, 2
        // Predicated region
        $region76: #{tpu_custom_call.1} parent=74 // pred_check
          %p895 = pneg %p175
        $region77: #{tpu_custom_call.1} parent=74 // pred_check_branch
          %897 = sbr.rel (%p895) target = $region79
        $region78: #{tpu_custom_call.1} parent=74 // pred_region
          %s898 = sand.u32 %s160, 1
          %s899 = scalar_lea.sflag [#allocation5], %s898
          %s900 = sand.u32 %s160, 1
          %s901 = smul.addr %s900, 96
          %s902 = scalar_lea.vmem [#allocation4], %s901
          %903 = dma.done %s899, 1536
        $region79: #{tpu_custom_call.1} parent=74 // pred_fallthru
          _
      $region75: #{tpu_custom_call.1} parent=5 // pred_fallthru
        _
    $region6: #{tpu_custom_call.1} parent=1 // loop_footer
      %s19 = sadd.s32 1, %s15
    $region7: #{tpu_custom_call.1} parent=1 // loop_footer_branch
      %14 = sbr.rel target = $region3
    $region8: #{tpu_custom_call.1} parent=1 // loop_exit
      _
    %904 = vsyncpa [#allocation5], 1
    %s905 = scalar_lea.sflag [#allocation5], 1
    %906 = vsyncpa %s905, 1

</llo_original>
